<compile_context>
chip_gen: v6e
topology: v6e:2x2x1
jax: 0.10.0
libtpu: 0.0.40
codegen_flags: <defaults>
</compile_context>

<pallas_src>
import math
import jax
import jax.numpy as jnp
from jax.experimental import pallas as pl
from jax.experimental.pallas import tpu as pltpu


def make_pe_table(d_model: int, max_len: int = 500,
                  dtype=jnp.float32) -> jnp.ndarray:
    """Deterministic sinusoidal table, identical to the PyTorch __init__.

    Built once in f32 for accuracy, stored in `dtype` so the forward path never
    re-casts the whole (max_len, d_model) table per call.
    """
    position = jnp.arange(0, max_len, dtype=jnp.float32)[:, None]          # (max_len, 1)
    div_term = jnp.exp(jnp.arange(0, d_model, 2, dtype=jnp.float32)
                       * (-math.log(10000.0) / d_model))                   # (ceil(d/2),)
    pe = jnp.zeros((max_len, d_model), dtype=jnp.float32)
    pe = pe.at[:, 0::2].set(jnp.sin(position * div_term))
    # cos branch has floor(d/2) columns -> slice div_term so odd d_model works.
    pe = pe.at[:, 1::2].set(jnp.cos(position * div_term[: d_model // 2]))
    return pe.astype(dtype)


def _pe_add_kernel(x_ref, pe_ref, o_ref):
    # x_ref: (ts, tb, D), pe_ref: (ts, D) -> broadcast pe over the batch tile.
    # Cast only the small pe block if the table dtype differs from x's.
    o_ref[...] = x_ref[...] + pe_ref[...].astype(x_ref.dtype)[:, None, :]


# Block-size policy (applies to all generations; see header comment).
_TARGET_BLOCK_BYTES = 4 << 20    # ~4 MiB per x block
_MAX_BLOCK_BYTES = 8 << 20       # hard cap before falling back to batch tiling
_VMEM_LIMIT_BYTES = 48 << 20     # legal on v5e/v6e/v7x; holds 2x(in+out)+pe


def _round_up(n: int, m: int) -> int:
    return ((n + m - 1) // m) * m


def _choose_tiles(S: int, B: int, D: int, itemsize: int):
    """Pick (ts, tb) for x blocks of shape (ts, tb, D).

    Preferred: tb = B (full, contiguous batch) and a 1-D grid over sequence
    tiles, with ts a multiple of 8 (keeps the 2-D pe block (ts, D) legal) sized
    for ~_TARGET_BLOCK_BYTES.  Only when even an 8-row full-batch block would
    exceed _MAX_BLOCK_BYTES do we tile the batch axis as well.
    """
    row_bytes = B * D * itemsize            # one full-batch sequence row
    s_pad = _round_up(S, 8)

    if 8 * row_bytes <= _MAX_BLOCK_BYTES:
        ts = max(8, (_TARGET_BLOCK_BYTES // row_bytes) // 8 * 8)
        ts = min(ts, s_pad)
        return ts, B

    # Fallback for very large B*D: tile batch too (multiple of 8, or full B).
    tb = max(8, (_TARGET_BLOCK_BYTES // (8 * D * itemsize)) // 8 * 8)
    if tb >= B:
        tb = B
    return 8, tb


def position_encoding_forward(x: jnp.ndarray, pe: jnp.ndarray,
                              *, donate_x: bool = False) -> jnp.ndarray:
    """x: (S, B, D); pe: (max_len, D). Returns x + pe[:S, None, :]."""
    S, B, D = x.shape
    max_len, d_model = pe.shape
    assert d_model == D, f"d_model mismatch: x has {D}, pe has {d_model}"
    assert S <= max_len, f"seq_len {S} exceeds max_len {max_len}"

    ts, tb = _choose_tiles(S, B, D, jnp.dtype(x.dtype).itemsize)

    if tb == B:
        # Preferred path: contiguous full-batch tiles, 1-D grid over sequence.
        grid = (pl.cdiv(S, ts),)
        in_specs = [
            pl.BlockSpec((ts, B, D), lambda i: (i, 0, 0)),
            # Full pe table passed; index_map selects only the rows needed.
            pl.BlockSpec((ts, D), lambda i: (i, 0)),
        ]
        out_specs = pl.BlockSpec((ts, B, D), lambda i: (i, 0, 0))
        dims = ("parallel",)
    else:
        # Fallback for huge B*D: 2-D grid, batch innermost so the pe block stays
        # resident (its index_map ignores the batch index -> no re-DMA).
        grid = (pl.cdiv(S, ts), pl.cdiv(B, tb))
        in_specs = [
            pl.BlockSpec((ts, tb, D), lambda i, j: (i, j, 0)),
            pl.BlockSpec((ts, D), lambda i, j: (i, 0)),
        ]
        out_specs = pl.BlockSpec((ts, tb, D), lambda i, j: (i, j, 0))
        dims = ("parallel", "parallel")

    return pl.pallas_call(
        _pe_add_kernel,
        out_shape=jax.ShapeDtypeStruct((S, B, D), x.dtype),
        grid_spec=pltpu.PrefetchScalarGridSpec(
            num_scalar_prefetch=0,
            grid=grid,
            in_specs=in_specs,
            out_specs=out_specs,
        ),
        compiler_params=pltpu.CompilerParams(
            dimension_semantics=dims,
            vmem_limit_bytes=_VMEM_LIMIT_BYTES,
        ),
        # Reuse x's HBM buffer for the output when the caller says x is dead.
        input_output_aliases=({0: 0} if donate_x else {}),
    )(x, pe)


if __name__ == "__main__":
    S, B, D = 8, 2, 32          # seq_len, batch, d_model
    MAX_LEN = 500

    key = jax.random.PRNGKey(0)
    x = jax.random.normal(key, (S, B, D), dtype=jnp.float32)
    pe = make_pe_table(D, MAX_LEN, dtype=x.dtype)   # table built in target dtype

    out = jax.block_until_ready(position_encoding_forward(x, pe))

    # Reference check (pure JAX), mirrors the PyTorch forward exactly.
    ref = x + pe[:S][:, None, :]
    assert out.shape == (S, B, D)
    assert jnp.allclose(out, ref, atol=1e-6, rtol=1e-6), "mismatch vs reference"

    print("KERNEL_OK")
</pallas_src>

<mosaic_0001>
module attributes {stable_mosaic.version = 11 : i64} {
  func.func @_pe_add_kernel(%arg0: i32, %arg1: memref<8x2x32xf32, #tpu.memory_space<vmem>>, %arg2: memref<8x32xf32, #tpu.memory_space<vmem>>, %arg3: memref<8x2x32xf32, #tpu.memory_space<vmem>>) attributes {dimension_semantics = [#tpu.dimension_semantics<parallel>], iteration_bounds = array<i64: 1>, scalar_prefetch = 0 : i64, scratch_operands = 0 : i64, tpu.core_type = #tpu.core_type<tc>, window_params = [{transform_indices = @transform_0, window_bounds = array<i64: 8, 2, 32>}, {transform_indices = @transform_1, window_bounds = array<i64: 8, 32>}, {transform_indices = @transform_2, window_bounds = array<i64: 8, 2, 32>}]} {
    %c0 = arith.constant 0 : index
    %c0_0 = arith.constant 0 : index
    %c0_1 = arith.constant 0 : index
    %0 = vector.load %arg1[%c0, %c0_0, %c0_1] : memref<8x2x32xf32, #tpu.memory_space<vmem>>, vector<8x2x32xf32>
    %c0_2 = arith.constant 0 : index
    %c0_3 = arith.constant 0 : index
    %1 = vector.load %arg2[%c0_2, %c0_3] : memref<8x32xf32, #tpu.memory_space<vmem>>, vector<8x32xf32>
    %2 = vector.shape_cast %1 : vector<8x32xf32> to vector<8x1x32xf32>
    %3 = vector.broadcast %2 : vector<8x1x32xf32> to vector<8x2x32xf32>
    %4 = arith.addf %0, %3 : vector<8x2x32xf32>
    %c0_4 = arith.constant 0 : index
    %c0_5 = arith.constant 0 : index
    %c0_6 = arith.constant 0 : index
    %5 = vector.load %arg3[%c0_4, %c0_5, %c0_6] : memref<8x2x32xf32, #tpu.memory_space<vmem>>, vector<8x2x32xf32>
    tpu.vector_store %arg3[%c0_4, %c0_5, %c0_6], %4 {strides = array<i32>} : memref<8x2x32xf32, #tpu.memory_space<vmem>>, vector<8x2x32xf32>,
    return
  }
  func.func @transform_0(%arg0: i32) -> (i32, i32, i32) {
    %c0_i32 = arith.constant 0 : i32
    %c0_i32_0 = arith.constant 0 : i32
    %c0_i32_1 = arith.constant 0 : i32
    return %arg0, %c0_i32, %c0_i32_0 : i32, i32, i32
  }
  func.func @transform_1(%arg0: i32) -> (i32, i32) {
    %c0_i32 = arith.constant 0 : i32
    %c0_i32_0 = arith.constant 0 : i32
    return %arg0, %c0_i32 : i32, i32
  }
  func.func @transform_2(%arg0: i32) -> (i32, i32, i32) {
    %c0_i32 = arith.constant 0 : i32
    %c0_i32_0 = arith.constant 0 : i32
    %c0_i32_1 = arith.constant 0 : i32
    return %arg0, %c0_i32, %c0_i32_0 : i32, i32, i32
  }
}

</mosaic_0001>

<llo_original>
// kernel: tpu_custom_call.1
$region0: #{tpu_custom_call.1}
  #allocation0 [shape = 'u32[]', space=smem, size = 0x4, offset = 0x4, fixed_abs, tag = 'smem constant byte address 0x4 - core index']
  #allocation1 [shape = 'u32[144,128]{1,0:T(1,128)}', space=vmem, size = 0x12000, scoped, tag = 'internal scratch']
  %s0 = inlined_call_operand.vmem [shape: f32[8,2,32], index: 0, kind: input, shape index: {}]
  %s1 = inlined_call_operand.vmem [shape: f32[500,32], index: 1, kind: input, shape index: {}]
  %s2 = inlined_call_operand.hbm [shape: f32[8,2,32], index: 2, kind: output, shape index: {}]
  %s3 = sld [smem:[#allocation0]]
  $region18: #{tpu_custom_call.1} parent=0
    _
  %s5 = ssub.s32 1, %s3
  %s6 = scalar_select 0, %s5, %s3
  $region1: #{tpu_custom_call.1} parent=0
    #allocation2 [shape = 'u8[8192]{0}', space=vmem, size = 0x2000, scoped, tag = 'output window, operand 0, single buffered']
    #allocation3 [shape = 's32[1]{0}', space=sflag, size = 0x4, scoped, tag = 'scoped memory for tpu_custom_call.1']
    %7 = vsyncpa [#allocation3], 0
    // Predicated region
    $region2: #{tpu_custom_call.1} parent=1 // pred_check
      _
    $region3: #{tpu_custom_call.1} parent=1 // pred_check_branch
      %9 = sbr.rel (0) target = $region5
    $region4: #{tpu_custom_call.1} parent=1 // pred_region
      _
    $region5: #{tpu_custom_call.1} parent=1 // pred_fallthru
      _
    // Predicated region
    $region6: #{tpu_custom_call.1} parent=1 // pred_check
      _
    $region7: #{tpu_custom_call.1} parent=1 // pred_check_branch
      %11 = sbr.rel (0) target = $region9
    $region8: #{tpu_custom_call.1} parent=1 // pred_region
      _
    $region9: #{tpu_custom_call.1} parent=1 // pred_fallthru
      _
    %v12 = vld [vmem:[%s0] sm:$0x3]
    %v13 = vld [vmem:[%s0 + $0x2] sm:$0x3]
    %v14 = vld [vmem:[%s0 + $0x4] sm:$0x3]
    %v15 = vld [vmem:[%s0 + $0x6] sm:$0x3]
    %v16 = vld [vmem:[%s0 + $0x8] sm:$0x3]
    %v17 = vld [vmem:[%s0 + $0xa] sm:$0x3]
    %v18 = vld [vmem:[%s0 + $0xc] sm:$0x3]
    %v19 = vld [vmem:[%s0 + $0xe] sm:$0x3]
    %v20 = vld [vmem:[%s1] sm:$0xff]
    %v22 = vcombine.high %v20, %v20
    %v24 = vunpack.c.l.s4 1966171168
    %v25 = vunpack.c.0.s8 %v24
    %v26 = vlaneseq
    %v27 = vshrl.u32 %v26, 7
    %v28 = vsub.s32 %v25, %v27
    %v29 = vrot.slane %v20, %v28
    %v31 = vunpack.c.l.s4 1966171168
    %v32 = vunpack.c.0.s8 %v31
    %v33 = vlaneseq
    %v34 = vshrl.u32 %v33, 7
    %v35 = vsub.s32 %v32, %v34
    %v36 = vrot.slane %v22, %v35
    %v37 = vcombine.high %v29, %v29
    %v38 = vcombine.high %v36, %v36
    %v40 = vunpack.c.l.s4 1966171168
    %v41 = vunpack.c.0.s8 %v40
    %v42 = vlaneseq
    %v43 = vshrl.u32 %v42, 7
    %v44 = vsub.s32 %v41, %v43
    %v45 = vrot.slane %v29, %v44
    %v47 = vunpack.c.l.s4 1966171168
    %v48 = vunpack.c.0.s8 %v47
    %v49 = vlaneseq
    %v50 = vshrl.u32 %v49, 7
    %v51 = vsub.s32 %v48, %v50
    %v52 = vrot.slane %v36, %v51
    %v54 = vunpack.c.l.s4 1966171168
    %v55 = vunpack.c.0.s8 %v54
    %v56 = vlaneseq
    %v57 = vshrl.u32 %v56, 7
    %v58 = vsub.s32 %v55, %v57
    %v59 = vrot.slane %v37, %v58
    %v61 = vunpack.c.l.s4 1966171168
    %v62 = vunpack.c.0.s8 %v61
    %v63 = vlaneseq
    %v64 = vshrl.u32 %v63, 7
    %v65 = vsub.s32 %v62, %v64
    %v66 = vrot.slane %v38, %v65
    %v67 = vcombine.high %v45, %v45
    %v68 = vcombine.high %v52, %v52
    %v69 = vcombine.high %v59, %v59
    %v70 = vcombine.high %v66, %v66
    %v71 = vlaneseq
    %v72 = vshrl.u32 %v71, 7
    %v73 = vsub.s32 0, %v72
    %v74 = vrot.slane %v45, %v73
    %v75 = vlaneseq
    %v76 = vshrl.u32 %v75, 7
    %v77 = vsub.s32 0, %v76
    %v78 = vrot.slane %v59, %v77
    %v79 = vlaneseq
    %v80 = vshrl.u32 %v79, 7
    %v81 = vsub.s32 0, %v80
    %v82 = vrot.slane %v67, %v81
    %v83 = vlaneseq
    %v84 = vshrl.u32 %v83, 7
    %v85 = vsub.s32 0, %v84
    %v86 = vrot.slane %v69, %v85
    %v87 = vlaneseq
    %v88 = vshrl.u32 %v87, 7
    %v89 = vsub.s32 0, %v88
    %v90 = vrot.slane %v52, %v89
    %v91 = vlaneseq
    %v92 = vshrl.u32 %v91, 7
    %v93 = vsub.s32 0, %v92
    %v94 = vrot.slane %v66, %v93
    %v95 = vlaneseq
    %v96 = vshrl.u32 %v95, 7
    %v97 = vsub.s32 0, %v96
    %v98 = vrot.slane %v68, %v97
    %v99 = vlaneseq
    %v100 = vshrl.u32 %v99, 7
    %v101 = vsub.s32 0, %v100
    %v102 = vrot.slane %v70, %v101
    %v111 = vadd.f32 %v12, %v74
    %v112 = vadd.f32 %v13, %v78
    %v113 = vadd.f32 %v14, %v82
    %v114 = vadd.f32 %v15, %v86
    %v115 = vadd.f32 %v16, %v90
    %v116 = vadd.f32 %v17, %v94
    %v117 = vadd.f32 %v18, %v98
    %v118 = vadd.f32 %v19, %v102
    %vm119 = vcmask 254976
    %120 = vst.msk [vmem:[#allocation2] sm:$0x3] %vm119, %v111
    %121 = vst.msk [vmem:[#allocation2 + $0x2] sm:$0x3] %vm119, %v112
    %122 = vst.msk [vmem:[#allocation2 + $0x4] sm:$0x3] %vm119, %v113
    %123 = vst.msk [vmem:[#allocation2 + $0x6] sm:$0x3] %vm119, %v114
    %124 = vst.msk [vmem:[#allocation2 + $0x8] sm:$0x3] %vm119, %v115
    %125 = vst.msk [vmem:[#allocation2 + $0xa] sm:$0x3] %vm119, %v116
    %126 = vst.msk [vmem:[#allocation2 + $0xc] sm:$0x3] %vm119, %v117
    %127 = vst.msk [vmem:[#allocation2 + $0xe] sm:$0x3] %vm119, %v118
    // Predicated region
    $region10: #{tpu_custom_call.1} parent=1 // pred_check
      _
    $region11: #{tpu_custom_call.1} parent=1 // pred_check_branch
      %129 = sbr.rel (0) target = $region13
    $region12: #{tpu_custom_call.1} parent=1 // pred_region
      %s131 = ssub.s32 256, 256
      %132 = vsyncadd [#allocation3], %s131
      %s133 = sshll.u32 [#allocation2], 4
      %s134 = int_to_ptr.vmem [resolvable:$true] %s133
      %139 = dma.vmem_to_hbm [thread:$0]  %s134, 256, %s2, [#allocation3], 32, 32, 2
    $region13: #{tpu_custom_call.1} parent=1 // pred_fallthru
      _
    // Predicated region
    $region14: #{tpu_custom_call.1} parent=1 // pred_check
      _
    $region15: #{tpu_custom_call.1} parent=1 // pred_check_branch
      %141 = sbr.rel (0) target = $region17
    $region16: #{tpu_custom_call.1} parent=1 // pred_region
      %142 = dma.done [#allocation3], 256
    $region17: #{tpu_custom_call.1} parent=1 // pred_fallthru
      _
    %143 = vsyncpa [#allocation3], 1

</llo_original>
